<compile_context>
chip_gen: v5e
topology: v5e:2x2
jax: 0.10.0
libtpu: 0.0.40
codegen_flags: <defaults>
</compile_context>

<pallas_src>
import jax
import jax.numpy as jnp
from jax.experimental import pallas as pl
from jax.experimental.pallas import tpu as pltpu


def _clas_kernel(x_ref, w1_ref, b1_ref, w2_ref, b2_ref, o_ref):
    # Layer 1: x @ W1^T + b1, ReLU.  MXU matmul with f32 accumulation.
    x = x_ref[...].astype(w1_ref.dtype)          # no-op for f32; bf16 fast path
    h = jnp.dot(x, w1_ref[...], preferred_element_type=jnp.float32)
    h = jnp.maximum(h + b1_ref[...], 0.0)        # bias/ReLU stay in f32 (VPU)
    # Layer 2: h @ W2^T + b2.  Explicit downcast of activations to the weight
    # dtype (no-op for f32 params; intentional for the bf16 path).
    y = jnp.dot(h.astype(w2_ref.dtype), w2_ref[...],
                preferred_element_type=jnp.float32)
    o_ref[...] = (y + b2_ref[...]).astype(o_ref.dtype)


def prepare_clas_params(w1, b1, w2, b2, *, weights_dtype=None):
    """One-time parameter prep: transpose to [in, out] and pad the hidden dim
    only to a multiple of 8 (sublane).  Output dim is NOT padded.

    Args:
      w1: [H, D] (PyTorch nn.Linear layout), b1: [H], w2: [O, H], b2: [O]
      weights_dtype: optional storage/MXU dtype for W1/W2 (e.g. jnp.bfloat16).
    Returns:
      (w1_t [D, Hp], b1_2d [1, Hp] f32, w2_t [Hp, O], b2_2d [1, O] f32)
    """
    w1 = jnp.asarray(w1)
    b1 = jnp.asarray(b1)
    w2 = jnp.asarray(w2)
    b2 = jnp.asarray(b2)
    H, D = w1.shape
    O = w2.shape[0]
    Hp = ((H + 7) // 8) * 8          # sublane multiple only; 64 stays 64
    wdt = w1.dtype if weights_dtype is None else jnp.dtype(weights_dtype)

    w1_t = jnp.zeros((D, Hp), wdt).at[:, :H].set(w1.T.astype(wdt))
    w2_t = jnp.zeros((Hp, O), wdt).at[:H, :].set(w2.T.astype(wdt))
    # Biases kept in f32: all elementwise work in the kernel is f32.
    b1_2d = jnp.zeros((1, Hp), jnp.float32).at[0, :H].set(b1.astype(jnp.float32))
    b2_2d = b2.astype(jnp.float32).reshape(1, O)
    return (w1_t, b1_2d, w2_t, b2_2d)


def _pick_batch_tile(B, requested):
    if requested is not None:
        bt = min(int(requested), B)
    elif B >= 512:
        bt = 256                          # fills the 256-deep MXU M dim (v6e/v7x)
    elif B >= 16:
        bt = max(8, (B // 2) // 8 * 8)    # >=2 grid steps: pipelining + v7x 2 TCs
    else:
        bt = B
    if bt != B and bt % 8 != 0:           # respect (8,128) sublane tiling
        bt = max(8, (bt // 8) * 8)
    return bt


def clas_forward(x, params, *, batch_tile=None):
    """Fused Pallas forward for Clas.

    Args:
      x:      [B, latent_dim]
      params: output of prepare_clas_params (pre-transposed / lightly padded).
      batch_tile: optional override for rows per grid step.
    Returns:
      [B, nrot]
    """
    w1_t, b1_2d, w2_t, b2_2d = params
    B, D = x.shape
    Hp = w1_t.shape[1]
    O = w2_t.shape[1]
    assert w1_t.shape[0] == D, "latent_dim mismatch between x and params"

    bt = _pick_batch_tile(B, batch_tile)
    steps = pl.cdiv(B, bt)
    Bp = steps * bt
    x_in = x if Bp == B else jnp.pad(x, ((0, Bp - B), (0, 0)))

    sz_x = jnp.dtype(x.dtype).itemsize
    sz_w = jnp.dtype(w1_t.dtype).itemsize
    cost = pl.CostEstimate(
        flops=2 * Bp * (D * Hp + Hp * O),
        transcendentals=0,
        bytes_accessed=(x_in.size * sz_x
                        + (w1_t.size + w2_t.size) * sz_w
                        + (b1_2d.size + b2_2d.size) * 4
                        + Bp * O * sz_x),
    )

    # Resident weights + double-buffered x/out tiles; raise the scoped VMEM
    # limit explicitly if the head ever widens enough to approach it.
    vmem_need = 2 * ((w1_t.size + w2_t.size) * sz_w
                     + (b1_2d.size + b2_2d.size) * 4
                     + bt * (D + O) * sz_x)
    vmem_limit = int(vmem_need * 3 // 2) if vmem_need > (24 << 20) else None

    out = pl.pallas_call(
        _clas_kernel,
        out_shape=jax.ShapeDtypeStruct((Bp, O), x.dtype),
        grid_spec=pl.GridSpec(
            grid=(steps,),
            in_specs=[
                pl.BlockSpec((bt, D), lambda i: (i, 0)),   # x tile (pipelined)
                pl.BlockSpec((D, Hp), lambda i: (0, 0)),   # W1^T, resident
                pl.BlockSpec((1, Hp), lambda i: (0, 0)),   # b1,   resident
                pl.BlockSpec((Hp, O), lambda i: (0, 0)),   # W2^T, resident
                pl.BlockSpec((1, O), lambda i: (0, 0)),    # b2,   resident
            ],
            # Unpadded (bt, nrot) output: masked vst, but ~32x fewer HBM write
            # bytes than a 128-padded slab and no post-kernel slice copy.
            out_specs=pl.BlockSpec((bt, O), lambda i: (i, 0)),
        ),
        compiler_params=pltpu.CompilerParams(
            dimension_semantics=("parallel",),
            vmem_limit_bytes=vmem_limit,
        ),
        cost_estimate=cost,
    )(x_in, w1_t, b1_2d, w2_t, b2_2d)

    return out if Bp == B else out[:B]


def init_clas_params(key, latent_dim, Lvpj, nrot):
    """Deterministic init mimicking PyTorch nn.Linear default U(-1/sqrt(fan_in), +)."""
    k1, k2, k3, k4 = jax.random.split(key, 4)
    H = Lvpj[0]
    lim1 = 1.0 / jnp.sqrt(latent_dim)
    lim2 = 1.0 / jnp.sqrt(H)
    w1 = jax.random.uniform(k1, (H, latent_dim), jnp.float32, -lim1, lim1)
    b1 = jax.random.uniform(k2, (H,), jnp.float32, -lim1, lim1)
    w2 = jax.random.uniform(k3, (nrot, H), jnp.float32, -lim2, lim2)
    b2 = jax.random.uniform(k4, (nrot,), jnp.float32, -lim2, lim2)
    return w1, b1, w2, b2


def clas_reference(x, w1, b1, w2, b2):
    h = jnp.maximum(x @ w1.T + b1, 0.0)
    return h @ w2.T + b2


# TODO(synk): bnorm=True (nn.BatchNorm1d) and depth>2 hidden layers are not
# exercised by the module defaults and are not fused into this kernel.

if __name__ == "__main__":
    # Shapes consistent with Clas(Lvpj=[64, 16], latent_dim=32, nrot=4, depth=2)
    latent_dim = 32
    Lvpj = [64, 16]
    nrot = 4
    B = 16

    key = jax.random.PRNGKey(0)
    kx, kp = jax.random.split(key)
    x = jax.random.normal(kx, (B, latent_dim), jnp.float32)
    w1, b1, w2, b2 = init_clas_params(kp, latent_dim, Lvpj, nrot)
    y_ref = clas_reference(x, w1, b1, w2, b2)

    # Exact f32 path (default): bt=8 -> grid=(2,), pipelined x/out tiles.
    params_f32 = prepare_clas_params(w1, b1, w2, b2)
    y = jax.block_until_ready(clas_forward(x, params_f32))
    assert y.shape == (B, nrot)
    assert jnp.allclose(y, y_ref, atol=1e-5, rtol=1e-5), "f32 mismatch vs reference"

    # bf16-weight fast path (half the weight DMA; bf16 MXU on v6e/v7x).
    params_bf16 = prepare_clas_params(w1, b1, w2, b2, weights_dtype=jnp.bfloat16)
    y16 = jax.block_until_ready(clas_forward(x, params_bf16))
    assert jnp.allclose(y16, y_ref, atol=5e-2, rtol=5e-2), "bf16 mismatch vs reference"

    # Non-divisible batch exercises the cdiv-grid + row-padding path.
    xb = jax.random.normal(kx, (36, latent_dim), jnp.float32)
    yb = jax.block_until_ready(clas_forward(xb, params_f32))
    assert yb.shape == (36, nrot)
    assert jnp.allclose(yb, clas_reference(xb, w1, b1, w2, b2), atol=1e-5, rtol=1e-5)

    print("KERNEL_OK")
</pallas_src>

<mosaic_0001>
module attributes {stable_mosaic.version = 11 : i64} {
  func.func @_clas_kernel(%arg0: i32, %arg1: memref<8x32xf32, #tpu.memory_space<vmem>>, %arg2: memref<32x64xf32, #tpu.memory_space<vmem>>, %arg3: memref<1x64xf32, #tpu.memory_space<vmem>>, %arg4: memref<64x4xf32, #tpu.memory_space<vmem>>, %arg5: memref<1x4xf32, #tpu.memory_space<vmem>>, %arg6: memref<8x4xf32, #tpu.memory_space<vmem>>) attributes {dimension_semantics = [#tpu.dimension_semantics<parallel>], iteration_bounds = array<i64: 2>, scalar_prefetch = 0 : i64, scratch_operands = 0 : i64, tpu.core_type = #tpu.core_type<tc>, window_params = [{transform_indices = @transform_0, window_bounds = array<i64: 8, 32>}, {pipeline_mode = #tpu.pipeline_mode<synchronous>, transform_indices = @transform_1, window_bounds = array<i64: 32, 64>}, {pipeline_mode = #tpu.pipeline_mode<synchronous>, transform_indices = @transform_2, window_bounds = array<i64: 1, 64>}, {pipeline_mode = #tpu.pipeline_mode<synchronous>, transform_indices = @transform_3, window_bounds = array<i64: 64, 4>}, {pipeline_mode = #tpu.pipeline_mode<synchronous>, transform_indices = @transform_4, window_bounds = array<i64: 1, 4>}, {transform_indices = @transform_5, window_bounds = array<i64: 8, 4>}]} {
    %c0 = arith.constant 0 : index
    %c0_0 = arith.constant 0 : index
    %0 = vector.load %arg1[%c0, %c0_0] : memref<8x32xf32, #tpu.memory_space<vmem>>, vector<8x32xf32>
    %c0_1 = arith.constant 0 : index
    %c0_2 = arith.constant 0 : index
    %1 = vector.load %arg2[%c0_1, %c0_2] : memref<32x64xf32, #tpu.memory_space<vmem>>, vector<32x64xf32>
    %cst = arith.constant dense<0.000000e+00> : vector<8x64xf32>
    %2 = tpu.matmul %0, %1, %cst {dimension_numbers = #tpu.dot_dimension_numbers<[1], [0], [0], [1], [0, 0, 1, 1], [], []>} : vector<8x32xf32>, vector<32x64xf32>, vector<8x64xf32> -> vector<8x64xf32>
    %c0_3 = arith.constant 0 : index
    %c0_4 = arith.constant 0 : index
    %3 = vector.load %arg3[%c0_3, %c0_4] : memref<1x64xf32, #tpu.memory_space<vmem>>, vector<1x64xf32>
    %4 = vector.broadcast %3 : vector<1x64xf32> to vector<8x64xf32>
    %5 = arith.addf %2, %4 : vector<8x64xf32>
    %cst_5 = arith.constant 0.000000e+00 : f32
    %6 = vector.broadcast %cst_5 : f32 to vector<8x64xf32>
    %7 = arith.maximumf %5, %6 : vector<8x64xf32>
    %c0_6 = arith.constant 0 : index
    %c0_7 = arith.constant 0 : index
    %8 = vector.load %arg4[%c0_6, %c0_7] : memref<64x4xf32, #tpu.memory_space<vmem>>, vector<64x4xf32>
    %cst_8 = arith.constant dense<0.000000e+00> : vector<8x4xf32>
    %9 = tpu.matmul %7, %8, %cst_8 {dimension_numbers = #tpu.dot_dimension_numbers<[1], [0], [0], [1], [0, 0, 1, 1], [], []>} : vector<8x64xf32>, vector<64x4xf32>, vector<8x4xf32> -> vector<8x4xf32>
    %c0_9 = arith.constant 0 : index
    %c0_10 = arith.constant 0 : index
    %10 = vector.load %arg5[%c0_9, %c0_10] : memref<1x4xf32, #tpu.memory_space<vmem>>, vector<1x4xf32>
    %11 = vector.broadcast %10 : vector<1x4xf32> to vector<8x4xf32>
    %12 = arith.addf %9, %11 : vector<8x4xf32>
    %c0_11 = arith.constant 0 : index
    %c0_12 = arith.constant 0 : index
    %13 = vector.load %arg6[%c0_11, %c0_12] : memref<8x4xf32, #tpu.memory_space<vmem>>, vector<8x4xf32>
    tpu.vector_store %arg6[%c0_11, %c0_12], %12 {strides = array<i32>} : memref<8x4xf32, #tpu.memory_space<vmem>>, vector<8x4xf32>,
    return
  }
  func.func @transform_0(%arg0: i32) -> (i32, i32) {
    %c0_i32 = arith.constant 0 : i32
    %c0_i32_0 = arith.constant 0 : i32
    return %arg0, %c0_i32 : i32, i32
  }
  func.func @transform_1(%arg0: i32) -> (i32, i32) {
    %c0_i32 = arith.constant 0 : i32
    %c0_i32_0 = arith.constant 0 : i32
    %c0_i32_1 = arith.constant 0 : i32
    return %c0_i32, %c0_i32_0 : i32, i32
  }
  func.func @transform_2(%arg0: i32) -> (i32, i32) {
    %c0_i32 = arith.constant 0 : i32
    %c0_i32_0 = arith.constant 0 : i32
    %c0_i32_1 = arith.constant 0 : i32
    return %c0_i32, %c0_i32_0 : i32, i32
  }
  func.func @transform_3(%arg0: i32) -> (i32, i32) {
    %c0_i32 = arith.constant 0 : i32
    %c0_i32_0 = arith.constant 0 : i32
    %c0_i32_1 = arith.constant 0 : i32
    return %c0_i32, %c0_i32_0 : i32, i32
  }
  func.func @transform_4(%arg0: i32) -> (i32, i32) {
    %c0_i32 = arith.constant 0 : i32
    %c0_i32_0 = arith.constant 0 : i32
    %c0_i32_1 = arith.constant 0 : i32
    return %c0_i32, %c0_i32_0 : i32, i32
  }
  func.func @transform_5(%arg0: i32) -> (i32, i32) {
    %c0_i32 = arith.constant 0 : i32
    %c0_i32_0 = arith.constant 0 : i32
    return %arg0, %c0_i32 : i32, i32
  }
}

</mosaic_0001>

<llo_original>
// kernel: tpu_custom_call.1
$region0: #{tpu_custom_call.1}
  #allocation0 [shape = 'u32[]', space=smem, size = 0x4, offset = 0x4, fixed_abs, tag = 'smem constant byte address 0x4 - core index']
  #allocation1 [shape = 'u32[72,128]{1,0:T(1,128)}', space=vmem, size = 0x9000, scoped, tag = 'internal scratch']
  %s0 = inlined_call_operand.vmem [shape: f32[16,32], index: 0, kind: input, shape index: {}]
  %s1 = inlined_call_operand.vmem [shape: f32[32,64], index: 1, kind: input, shape index: {}]
  %s2 = inlined_call_operand.vmem [shape: f32[1,64], index: 2, kind: input, shape index: {}]
  %s3 = inlined_call_operand.vmem [shape: f32[64,4], index: 3, kind: input, shape index: {}]
  %s4 = inlined_call_operand.vmem [shape: f32[1,4], index: 4, kind: input, shape index: {}]
  %s5 = inlined_call_operand.vmem [shape: f32[16,4], index: 5, kind: output, shape index: {}]
  %s6 = sld [smem:[#allocation0]]
  $region53: #{tpu_custom_call.1} parent=0
    _
  %s8 = ssub.s32 1, %s6
  %s9 = scalar_select 0, %s8, %s6
  loop: start=0, step=1, limit=4
  $region2: #{tpu_custom_call.1} parent=0 // loop_pre_header
    _
  $region3: #{tpu_custom_call.1} parent=0 // loop_header
    %s11 = sphi 0, %s15
    %p12 = scmp.ge.s32.totalorder %s11, 4
    %s21 = sphi 0, %s23
    %s24 = sphi 0, %s21
    %s25 = sphi 0, %s24
    %s41 = sphi 0, %s25
    %s45 = sphi 0, %s45
    %s47 = sphi 0, %s45
    %s48 = sphi 0, %s47
    %s62 = sphi 0, %s48
    %s66 = sphi 0, %s66
    %s68 = sphi 0, %s66
    %s69 = sphi 0, %s68
    %s83 = sphi 0, %s69
    %s87 = sphi 0, %s87
    %s89 = sphi 0, %s87
    %s90 = sphi 0, %s89
    %s104 = sphi 0, %s90
    %s108 = sphi 0, %s108
    %s110 = sphi 0, %s108
    %s111 = sphi 0, %s110
    %s125 = sphi 0, %s111
    %s131 = sphi 0, %s133
    %s134 = sphi 0, %s131
    %s135 = sphi 0, %s134
    %s151 = sphi 0, %s135
  $region4: #{tpu_custom_call.1} parent=0 // loop_header_branch
    %14 = sbr.rel (%p12) target = $region8
  $region5: #{tpu_custom_call.1} parent=0 // loop_body
    %s16 = ssub.s32 %s11, 1
    %s17 = ssub.s32 %s11, 2
    %s18 = sadd.s32 %s11, 1
    %s19 = ssub.s32 %s11, %s18
    %p20 = scmp.eq.s32.totalorder %s19, 0
    %s22 = sadd.s32 %s21, 1
    %s23 = scalar_select %p20, %s21, %s22
    %p26 = pneg %p20
    %p27 = scmp.eq.s32.totalorder %s11, 1
    %p28 = por %p26, %p27
    %p29 = scmp.ne.s32.totalorder %s21, %s24
    %p30 = scmp.eq.s32.totalorder %s11, 0
    %p31 = por %p29, %p30
    %p32 = scmp.ne.s32.totalorder %s21, %s24
    %p33 = scmp.eq.s32.totalorder %s16, 1
    %p34 = por %p32, %p33
    %p35 = scmp.ne.s32.totalorder %s24, %s25
    %p36 = scmp.eq.s32.totalorder %s16, 0
    %p37 = por %p35, %p36
    %p38 = scmp.ne.s32.totalorder %s24, %s25
    %p39 = scmp.eq.s32.totalorder %s17, 1
    %p40 = por %p38, %p39
    %p42 = scmp.ne.s32.totalorder %s25, %s41
    %p43 = scmp.eq.s32.totalorder %s17, 0
    %p44 = por %p42, %p43
    %s46 = sadd.s32 %s45, 1
    %p49 = scmp.eq.s32.totalorder %s11, 1
    %p50 = scmp.ne.s32.totalorder %s45, %s47
    %p51 = scmp.eq.s32.totalorder %s11, 0
    %p52 = por %p50, %p51
    %p53 = scmp.ne.s32.totalorder %s45, %s47
    %p54 = scmp.eq.s32.totalorder %s16, 1
    %p55 = por %p53, %p54
    %p56 = scmp.ne.s32.totalorder %s47, %s48
    %p57 = scmp.eq.s32.totalorder %s16, 0
    %p58 = por %p56, %p57
    %p59 = scmp.ne.s32.totalorder %s47, %s48
    %p60 = scmp.eq.s32.totalorder %s17, 1
    %p61 = por %p59, %p60
    %p63 = scmp.ne.s32.totalorder %s48, %s62
    %p64 = scmp.eq.s32.totalorder %s17, 0
    %p65 = por %p63, %p64
    %s67 = sadd.s32 %s66, 1
    %p70 = scmp.eq.s32.totalorder %s11, 1
    %p71 = scmp.ne.s32.totalorder %s66, %s68
    %p72 = scmp.eq.s32.totalorder %s11, 0
    %p73 = por %p71, %p72
    %p74 = scmp.ne.s32.totalorder %s66, %s68
    %p75 = scmp.eq.s32.totalorder %s16, 1
    %p76 = por %p74, %p75
    %p77 = scmp.ne.s32.totalorder %s68, %s69
    %p78 = scmp.eq.s32.totalorder %s16, 0
    %p79 = por %p77, %p78
    %p80 = scmp.ne.s32.totalorder %s68, %s69
    %p81 = scmp.eq.s32.totalorder %s17, 1
    %p82 = por %p80, %p81
    %p84 = scmp.ne.s32.totalorder %s69, %s83
    %p85 = scmp.eq.s32.totalorder %s17, 0
    %p86 = por %p84, %p85
    %s88 = sadd.s32 %s87, 1
    %p91 = scmp.eq.s32.totalorder %s11, 1
    %p92 = scmp.ne.s32.totalorder %s87, %s89
    %p93 = scmp.eq.s32.totalorder %s11, 0
    %p94 = por %p92, %p93
    %p95 = scmp.ne.s32.totalorder %s87, %s89
    %p96 = scmp.eq.s32.totalorder %s16, 1
    %p97 = por %p95, %p96
    %p98 = scmp.ne.s32.totalorder %s89, %s90
    %p99 = scmp.eq.s32.totalorder %s16, 0
    %p100 = por %p98, %p99
    %p101 = scmp.ne.s32.totalorder %s89, %s90
    %p102 = scmp.eq.s32.totalorder %s17, 1
    %p103 = por %p101, %p102
    %p105 = scmp.ne.s32.totalorder %s90, %s104
    %p106 = scmp.eq.s32.totalorder %s17, 0
    %p107 = por %p105, %p106
    %s109 = sadd.s32 %s108, 1
    %p112 = scmp.eq.s32.totalorder %s11, 1
    %p113 = scmp.ne.s32.totalorder %s108, %s110
    %p114 = scmp.eq.s32.totalorder %s11, 0
    %p115 = por %p113, %p114
    %p116 = scmp.ne.s32.totalorder %s108, %s110
    %p117 = scmp.eq.s32.totalorder %s16, 1
    %p118 = por %p116, %p117
    %p119 = scmp.ne.s32.totalorder %s110, %s111
    %p120 = scmp.eq.s32.totalorder %s16, 0
    %p121 = por %p119, %p120
    %p122 = scmp.ne.s32.totalorder %s110, %s111
    %p123 = scmp.eq.s32.totalorder %s17, 1
    %p124 = por %p122, %p123
    %p126 = scmp.ne.s32.totalorder %s111, %s125
    %p127 = scmp.eq.s32.totalorder %s17, 0
    %p128 = por %p126, %p127
    %s129 = ssub.s32 %s11, %s18
    %p130 = scmp.eq.s32.totalorder %s129, 0
    %s132 = sadd.s32 %s131, 1
    %s133 = scalar_select %p130, %s131, %s132
    %p136 = pneg %p130
    %p137 = scmp.eq.s32.totalorder %s11, 1
    %p138 = por %p136, %p137
    %p139 = scmp.ne.s32.totalorder %s131, %s134
    %p140 = scmp.eq.s32.totalorder %s11, 0
    %p141 = por %p139, %p140
    %p142 = scmp.ne.s32.totalorder %s131, %s134
    %p143 = scmp.eq.s32.totalorder %s16, 1
    %p144 = por %p142, %p143
    %p145 = scmp.ne.s32.totalorder %s134, %s135
    %p146 = scmp.eq.s32.totalorder %s16, 0
    %p147 = por %p145, %p146
    %p148 = scmp.ne.s32.totalorder %s134, %s135
    %p149 = scmp.eq.s32.totalorder %s17, 1
    %p150 = por %p148, %p149
    %p152 = scmp.ne.s32.totalorder %s135, %s151
    %p153 = scmp.eq.s32.totalorder %s17, 0
    %p154 = por %p152, %p153
    %p155 = scmp.le.s32.totalorder 1, %s11
    %p156 = scmp.lt.s32.totalorder %s11, 3
    %p157 = pnand %p155, %p156
    %p158 = pneg %p157
    // Predicated region
    $region9: #{tpu_custom_call.1} parent=5 // pred_check
      _
    $region10: #{tpu_custom_call.1} parent=5 // pred_check_branch
      %160 = sbr.rel (%p157) target = $region12
    $region11: #{tpu_custom_call.1} parent=5 // pred_region
      %s161 = ssub.s32 %s11, 1
      // Predicated region
      $region13: #{tpu_custom_call.1} parent=11 // pred_check
        %p162 = pneg %p58
      $region14: #{tpu_custom_call.1} parent=11 // pred_check_branch
        %164 = sbr.rel (%p162) target = $region16
      $region15: #{tpu_custom_call.1} parent=11 // pred_region
        _
      $region16: #{tpu_custom_call.1} parent=11 // pred_fallthru
        _
      // Predicated region
      $region17: #{tpu_custom_call.1} parent=11 // pred_check
        %p165 = pneg %p79
      $region18: #{tpu_custom_call.1} parent=11 // pred_check_branch
        %167 = sbr.rel (%p165) target = $region20
      $region19: #{tpu_custom_call.1} parent=11 // pred_region
        _
      $region20: #{tpu_custom_call.1} parent=11 // pred_fallthru
        _
      // Predicated region
      $region21: #{tpu_custom_call.1} parent=11 // pred_check
        %p168 = pneg %p100
      $region22: #{tpu_custom_call.1} parent=11 // pred_check_branch
        %170 = sbr.rel (%p168) target = $region24
      $region23: #{tpu_custom_call.1} parent=11 // pred_region
        _
      $region24: #{tpu_custom_call.1} parent=11 // pred_fallthru
        _
      // Predicated region
      $region25: #{tpu_custom_call.1} parent=11 // pred_check
        %p171 = pneg %p121
      $region26: #{tpu_custom_call.1} parent=11 // pred_check_branch
        %173 = sbr.rel (%p171) target = $region28
      $region27: #{tpu_custom_call.1} parent=11 // pred_region
        _
      $region28: #{tpu_custom_call.1} parent=11 // pred_fallthru
        _
    $region12: #{tpu_custom_call.1} parent=5 // pred_fallthru
      _
    %p174 = scmp.lt.s32.totalorder %s11, 2
    // Predicated region
    $region29: #{tpu_custom_call.1} parent=5 // pred_check
      %p175 = pneg %p174
    $region30: #{tpu_custom_call.1} parent=5 // pred_check_branch
      %177 = sbr.rel (%p175) target = $region32
    $region31: #{tpu_custom_call.1} parent=5 // pred_region
      // Predicated region
      $region33: #{tpu_custom_call.1} parent=31 // pred_check
        %p178 = pneg %p31
      $region34: #{tpu_custom_call.1} parent=31 // pred_check_branch
        %180 = sbr.rel (%p178) target = $region36
      $region35: #{tpu_custom_call.1} parent=31 // pred_region
        %p181 = scmp.lt.s32.totalorder %s11, 1
        %s182 = scalar_select %p181, %s11, 1
        %s183 = smul.addr %s182, 8
        %s184 = scalar_lea.vmem %s0, %s183
      $region36: #{tpu_custom_call.1} parent=31 // pred_fallthru
        _
    $region32: #{tpu_custom_call.1} parent=5 // pred_fallthru
      _
    %p185 = scmp.le.s32.totalorder 1, %s11
    %p186 = scmp.lt.s32.totalorder %s11, 3
    %p187 = pnand %p185, %p186
    %p188 = pneg %p187
    // Predicated region
    $region37: #{tpu_custom_call.1} parent=5 // pred_check
      _
    $region38: #{tpu_custom_call.1} parent=5 // pred_check_branch
      %190 = sbr.rel (%p187) target = $region40
    $region39: #{tpu_custom_call.1} parent=5 // pred_region
      %s191 = ssub.s32 %s11, 1
      %p192 = scmp.lt.s32.totalorder %s16, 1
      %s193 = scalar_select %p192, %s16, 1
      %s194 = smul.addr %s193, 8
      %s195 = scalar_lea.vmem %s0, %s194
      %p196 = pneg %p37
      %p197 = pneg %p34
      %p198 = pneg %p58
      %p199 = pneg %p55
      %p200 = pneg %p79
      %p201 = pneg %p76
      %p202 = pneg %p100
      %p203 = pneg %p97
      %p204 = pneg %p121
      %p205 = pneg %p118
      %p206 = pneg %p147
      %p207 = pneg %p144
      %p208 = scmp.lt.s32.totalorder %s16, 1
      %s209 = scalar_select %p208, %s16, 1
      %s210 = smul.addr %s209, 8
      %s211 = scalar_lea.vmem %s5, %s210
      %p212 = scmp.lt.s32.totalorder %s16, 1
      %s213 = scalar_select %p212, %s16, 1
      %s214 = smul.addr %s213, 8
      %s215 = scalar_lea.vmem %s0, %s214
      %p216 = scmp.lt.s32.totalorder %s16, 1
      %s217 = scalar_select %p216, %s16, 1
      %s218 = smul.addr %s217, 8
      %s219 = scalar_lea.vmem %s5, %s218
      %v220 = vld [vmem:[%s215] sm:$0xff]
      %v221 = vld [vmem:[%s1] sm:$0xff]
      %v222 = vld [vmem:[%s1 + $0x8] sm:$0xff]
      %v223 = vld [vmem:[%s1 + $0x10] sm:$0xff]
      %v224 = vld [vmem:[%s1 + $0x18] sm:$0xff]
      %v225 = vld [vmem:[%s2] sm:$0x1]
      %v227 = vperm.slane %v225, 0
      %vm229 = vcmask 261120
      %v231 = vsel %vm229, %v220, 0
      %233 = vmatpush.msra.mxu0 0.0
      %234 = vmatpush.msra.mxu0 0.0
      %235 = vmatpush.msra.mxu0 0.0
      %236 = vmatpush.msra.mxu0 0.0
      %237 = vmatpush.msra.mxu0 0.0
      %238 = vmatpush.msra.mxu0 0.0
      %239 = vmatpush.msra.mxu0 0.0
      %240 = vmatpush.msra.mxu0 0.0
      %241 = vmatpush.msra.mxu0 0.0
      %242 = vmatpush.msra.mxu0 0.0
      %243 = vmatpush.msra.mxu0 0.0
      %244 = vmatpush.msra.mxu0 0.0
      %245 = vmatpush.msra.mxu0 %v224
      %246 = vmatpush.msra.mxu0 %v223
      %247 = vmatpush.msra.mxu0 %v222
      %248 = vmatpush.msra.mxu0 %v221
      %249 = vmatmul.f32.gmra.mxu0 %v231
      %v250 = vpop.f32.mrf.mxu0
      %v251 = vadd.f32 %v227, %v250
      %252 = vdwg.mxu0
      %v253 = vmax.f32 %v251, 0.0
      %v254 = vld [vmem:[%s3] sm:$0xff]
      %v255 = vld [vmem:[%s3 + $0x8] sm:$0xff]
      %v256 = vld [vmem:[%s3 + $0x10] sm:$0xff]
      %v257 = vld [vmem:[%s3 + $0x18] sm:$0xff]
      %v258 = vld [vmem:[%s3 + $0x20] sm:$0xff]
      %v259 = vld [vmem:[%s3 + $0x28] sm:$0xff]
      %v260 = vld [vmem:[%s3 + $0x30] sm:$0xff]
      %v261 = vld [vmem:[%s3 + $0x38] sm:$0xff]
      %v262 = vld [vmem:[%s4] sm:$0x1]
      %v264 = vperm.slane %v262, 0
      %vm266 = vcmask 523264
      %v268 = vsel %vm266, %v253, 0
      %270 = vmatpush.msra.mxu0 0.0
      %271 = vmatpush.msra.mxu0 0.0
      %272 = vmatpush.msra.mxu0 0.0
      %273 = vmatpush.msra.mxu0 0.0
      %274 = vmatpush.msra.mxu0 0.0
      %275 = vmatpush.msra.mxu0 0.0
      %276 = vmatpush.msra.mxu0 0.0
      %277 = vmatpush.msra.mxu0 0.0
      %278 = vmatpush.msra.mxu0 %v261
      %279 = vmatpush.msra.mxu0 %v260
      %280 = vmatpush.msra.mxu0 %v259
      %281 = vmatpush.msra.mxu0 %v258
      %282 = vmatpush.msra.mxu0 %v257
      %283 = vmatpush.msra.mxu0 %v256
      %284 = vmatpush.msra.mxu0 %v255
      %285 = vmatpush.msra.mxu0 %v254
      %286 = vmatmul.f32.gmra.mxu0 %v268
      %v287 = vpop.f32.mrf.mxu0
      %v288 = vadd.f32 %v264, %v287
      %289 = vdwg.mxu0
      %vm290 = vcmask 31744
      %291 = vst.msk [vmem:[%s219] sm:$0xff] %vm290, %v288
      %p292 = scmp.lt.s32.totalorder %s16, 1
      %s293 = scalar_select %p292, %s16, 1
      %s294 = smul.addr %s293, 8
      %s295 = scalar_lea.vmem %s5, %s294
      // Predicated region
      $region41: #{tpu_custom_call.1} parent=39 // pred_check
        %p296 = pneg %p144
      $region42: #{tpu_custom_call.1} parent=39 // pred_check_branch
        %298 = sbr.rel (%p296) target = $region44
      $region43: #{tpu_custom_call.1} parent=39 // pred_region
        _
      $region44: #{tpu_custom_call.1} parent=39 // pred_fallthru
        _
    $region40: #{tpu_custom_call.1} parent=5 // pred_fallthru
      _
    %p299 = scmp.le.s32.totalorder 2, %s11
    // Predicated region
    $region45: #{tpu_custom_call.1} parent=5 // pred_check
      %p300 = pneg %p299
    $region46: #{tpu_custom_call.1} parent=5 // pred_check_branch
      %302 = sbr.rel (%p300) target = $region48
    $region47: #{tpu_custom_call.1} parent=5 // pred_region
      %s303 = ssub.s32 %s11, 2
      // Predicated region
      $region49: #{tpu_custom_call.1} parent=47 // pred_check
        %p304 = pneg %p150
      $region50: #{tpu_custom_call.1} parent=47 // pred_check_branch
        %306 = sbr.rel (%p304) target = $region52
      $region51: #{tpu_custom_call.1} parent=47 // pred_region
        %p307 = scmp.lt.s32.totalorder %s17, 1
        %s308 = scalar_select %p307, %s17, 1
        %s309 = smul.addr %s308, 8
        %s310 = scalar_lea.vmem %s5, %s309
      $region52: #{tpu_custom_call.1} parent=47 // pred_fallthru
        _
    $region48: #{tpu_custom_call.1} parent=5 // pred_fallthru
      _
  $region6: #{tpu_custom_call.1} parent=0 // loop_footer
    %s15 = sadd.s32 1, %s11
  $region7: #{tpu_custom_call.1} parent=0 // loop_footer_branch
    %10 = sbr.rel target = $region3
  $region8: #{tpu_custom_call.1} parent=0 // loop_exit
    _

</llo_original>
